<compile_context>
chip_gen: v6e
topology: v6e:2x2x1
jax: 0.10.0
libtpu: 0.0.40
codegen_flags: <defaults>
</compile_context>

<pallas_src>
import jax
import jax.numpy as jnp
from jax.experimental import pallas as pl
from jax.experimental.pallas import tpu as pltpu


_LANE = 128
_PREFERRED_LANES = (1024, 512, 256, 128)   # lane-dense slab widths (mult. of 128)


def _round_up(x: int, m: int) -> int:
    return -(-x // m) * m


def _target_block_bytes() -> int:
    """Generation-aware per-block byte budget (in + out are double-buffered,
    so peak VMEM for the pipeline is ~4x this)."""
    try:
        kind = jax.devices()[0].device_kind.lower()
    except Exception:
        kind = ""
    if "v7" in kind:
        return 8 << 20   # 3.2 TB/s HBM: amortize ~0.35us/step; 4x8 MiB < 64 MiB VMEM
    if "v6" in kind:
        return 4 << 20   # 16 MiB of buffers, inside the 32 MiB scoped default
    return 2 << 20       # v5e / unknown: conservative (16 MiB scoped default)


def _sublane(dtype) -> int:
    """Second-minor tiling granularity for the dtype (8 f32 / 16 bf16 / 32 int8)."""
    return {1: 32, 2: 16, 4: 8}.get(jnp.dtype(dtype).itemsize, 8)


def _interface_forward_kernel(img_ref, out_ref):
    """One lane-dense block per grid step: pure streaming copy."""
    x = img_ref[...]
    # TODO(synk): Interface.forward / Interface._transform are abstract in the
    # reference module; a concrete augmentation subclass fuses its elementwise
    # transform on `x` here (free filler under this DMA-bound regime).
    out_ref[...] = x


def _stream_slab(slab: jax.Array, tile_rows: int, tile_lanes: int) -> jax.Array:
    """Stream a 2-D slab through VMEM in (tile_rows, tile_lanes) blocks."""
    rows, lanes = slab.shape
    grid = (pl.cdiv(rows, tile_rows), pl.cdiv(lanes, tile_lanes))
    return pl.pallas_call(
        _interface_forward_kernel,
        out_shape=jax.ShapeDtypeStruct((rows, lanes), slab.dtype),
        grid=grid,
        in_specs=[pl.BlockSpec((tile_rows, tile_lanes), lambda i, j: (i, j))],
        out_specs=pl.BlockSpec((tile_rows, tile_lanes), lambda i, j: (i, j)),
        input_output_aliases={0: 0},
        compiler_params=pltpu.CompilerParams(
            dimension_semantics=("parallel", "parallel"),
            vmem_limit_bytes=48 << 20,
        ),
    )(slab)


def _forward_impl(img: jax.Array) -> jax.Array:
    orig_shape = img.shape
    total = img.size
    if total == 0:
        return img

    itemsize = jnp.dtype(img.dtype).itemsize
    sub = _sublane(img.dtype)
    budget = _target_block_bytes()

    flat = img.reshape(-1)
    lanes = next((l for l in _PREFERRED_LANES if total % l == 0), None)

    if lanes is not None:
        # Lane-dense slab: unmasked full-width vst on every block.
        rows = total // lanes
        slab = flat.reshape(rows, lanes)
        tile_rows = max(sub, (budget // (lanes * itemsize)) // sub * sub)
        if tile_rows >= rows:
            tile_rows = rows                       # single block == full array dims
        else:
            nblk = pl.cdiv(rows, tile_rows)
            if nblk > 1 and nblk % 2 == 1:
                # Balance block count across v7x's two TensorCores.
                tile_rows = max(sub, _round_up(pl.cdiv(rows, nblk + 1), sub))
        out = _stream_slab(slab, tile_rows, lanes)
    else:
        # Ragged element count (not a multiple of 128): 1-row slab tiled along
        # lanes; pl.cdiv grid lets Pallas mask the single ragged tail block —
        # no host-side pad/slice passes.
        slab = flat.reshape(1, total)
        tile_lanes = max(_LANE, (budget // itemsize) // _LANE * _LANE)
        if tile_lanes >= total:
            tile_lanes = total
        out = _stream_slab(slab, 1, tile_lanes)

    return out.reshape(orig_shape)


# NOTE: donate_argnums=0 consumes the caller's `img` buffer so the
# input_output_aliases={0: 0} inside the pallas_call avoids an extra defensive
# HBM copy.  Callers that need `img` afterwards should keep their own copy.
interface_forward = jax.jit(_forward_impl, donate_argnums=0)


if __name__ == "__main__":
    key = jax.random.PRNGKey(0)
    x = jax.random.normal(key, (2, 4, 16, 16), dtype=jnp.float32)
    x_ref = jax.device_get(x)          # host copy; `x` is donated below

    y = interface_forward(x)
    jax.block_until_ready(y)

    assert y.shape == (2, 4, 16, 16)
    assert y.dtype == jnp.float32
    assert bool(jnp.allclose(y, jnp.asarray(x_ref))), "identity pass-through mismatch"

    print("KERNEL_OK")
</pallas_src>

<mosaic_0001>
module attributes {stable_mosaic.version = 11 : i64} {
  func.func @_interface_forward_kernel(%arg0: i32, %arg1: i32, %arg2: memref<2x1024xf32, #tpu.memory_space<vmem>>, %arg3: memref<2x1024xf32, #tpu.memory_space<vmem>>) attributes {dimension_semantics = [#tpu.dimension_semantics<parallel>, #tpu.dimension_semantics<parallel>], iteration_bounds = array<i64: 1, 1>, scalar_prefetch = 0 : i64, scratch_operands = 0 : i64, tpu.core_type = #tpu.core_type<tc>, window_params = [{transform_indices = @transform_0, window_bounds = array<i64: 2, 1024>}, {transform_indices = @transform_1, window_bounds = array<i64: 2, 1024>}]} {
    %c0 = arith.constant 0 : index
    %c0_0 = arith.constant 0 : index
    %0 = vector.load %arg2[%c0, %c0_0] : memref<2x1024xf32, #tpu.memory_space<vmem>>, vector<2x1024xf32>
    %c0_1 = arith.constant 0 : index
    %c0_2 = arith.constant 0 : index
    %1 = vector.load %arg3[%c0_1, %c0_2] : memref<2x1024xf32, #tpu.memory_space<vmem>>, vector<2x1024xf32>
    tpu.vector_store %arg3[%c0_1, %c0_2], %0 {strides = array<i32>} : memref<2x1024xf32, #tpu.memory_space<vmem>>, vector<2x1024xf32>,
    return
  }
  func.func @transform_0(%arg0: i32, %arg1: i32) -> (i32, i32) {
    %c0_i32 = arith.constant 0 : i32
    return %arg0, %arg1 : i32, i32
  }
  func.func @transform_1(%arg0: i32, %arg1: i32) -> (i32, i32) {
    %c0_i32 = arith.constant 0 : i32
    return %arg0, %arg1 : i32, i32
  }
}

</mosaic_0001>

<llo_original>
// kernel: _forward_impl.1
$region0: #{_forward_impl.1}
  #allocation0 [shape = 'u32[]', space=smem, size = 0x4, offset = 0x4, fixed_abs, tag = 'smem constant byte address 0x4 - core index']
  #allocation1 [shape = 'u32[144,128]{1,0:T(1,128)}', space=vmem, size = 0x12000, scoped, tag = 'internal scratch']
  %s0 = inlined_call_operand.vmem [shape: f32[2,1024], index: 0, kind: input, shape index: {}, may-alias: {0,1}]
  %s1 = inlined_call_operand.vmem [shape: f32[2,1024], index: 1, kind: output, shape index: {}, may-alias: {0,1}]
  %s2 = sld [smem:[#allocation0]]
  $region14: #{_forward_impl.1} parent=0
    _
  %s4 = ssub.s32 1, %s2
  %s5 = scalar_select 0, %s4, %s2
  // Predicated region
  $region2: #{_forward_impl.1} parent=0 // pred_check
    _
  $region3: #{_forward_impl.1} parent=0 // pred_check_branch
    %7 = sbr.rel (0) target = $region5
  $region4: #{_forward_impl.1} parent=0 // pred_region
    _
  $region5: #{_forward_impl.1} parent=0 // pred_fallthru
    _
  %v8 = vld [vmem:[%s0] sm:$0xff]
  %v9 = vld [vmem:[%s0 + $0x8] sm:$0xff]
  %10 = vst [vmem:[%s1] sm:$0xff] %v8
  %11 = vst [vmem:[%s1 + $0x8] sm:$0xff] %v9
  // Predicated region
  $region6: #{_forward_impl.1} parent=0 // pred_check
    _
  $region7: #{_forward_impl.1} parent=0 // pred_check_branch
    %13 = sbr.rel (0) target = $region9
  $region8: #{_forward_impl.1} parent=0 // pred_region
    _
  $region9: #{_forward_impl.1} parent=0 // pred_fallthru
    _
  // Predicated region
  $region10: #{_forward_impl.1} parent=0 // pred_check
    _
  $region11: #{_forward_impl.1} parent=0 // pred_check_branch
    %15 = sbr.rel (0) target = $region13
  $region12: #{_forward_impl.1} parent=0 // pred_region
    _
  $region13: #{_forward_impl.1} parent=0 // pred_fallthru
    _

</llo_original>
